<compile_context>
chip_gen: v5e
topology: v5e:2x2
jax: 0.10.0
libtpu: 0.0.40
codegen_flags: <defaults>
</compile_context>

<pallas_src>
from functools import partial

import jax
import jax.numpy as jnp
from jax.experimental import pallas as pl
from jax.experimental.pallas import tpu as pltpu


def _round_up(x: int, m: int) -> int:
    return (x + m - 1) // m * m


def _patch_embed_kernel(p_ref, w_ref, b_ref, o_ref):
    # p_ref: (tm, K_pad)     patch tile (bf16)
    # w_ref: (K_pad, E_pad)  full projection weight, VMEM-resident (bf16)
    # b_ref: (1, E_pad)      bias (f32)
    # o_ref: (tm, E_pad)     output tile
    acc = jnp.dot(p_ref[...], w_ref[...], preferred_element_type=jnp.float32)
    o_ref[...] = (acc + b_ref[...]).astype(o_ref.dtype)


def _pick_tm(M: int) -> int:
    """Large, sublane-aligned M tile; >=2 grid steps when M is large enough."""
    if M < 512:
        return _round_up(M, 8)
    if M <= 1024:
        return 512
    return 1024


def _vmem_footprint_bytes(tm, k_pad, e_pad, out_bytes):
    # Double-buffered input/output tiles + resident weight + bias.
    return (2 * tm * k_pad * 2          # patches (bf16), 2 buffers
            + 2 * k_pad * e_pad * 2     # weight (bf16), 2 buffers
            + 2 * 1 * e_pad * 4         # bias (f32)
            + 2 * tm * e_pad * out_bytes)


@partial(jax.jit, static_argnames=("patch_size",))
def patch_embed_pallas(x, weight, bias, patch_size):
    """x: (B, C, H, W); weight: (E, C, ph, pw) (Conv2d layout); bias: (E,)."""
    B, C, H, W = x.shape
    ph, pw = patch_size
    assert H % ph == 0 and W % pw == 0, "image size must be divisible by patch size"
    gh, gw = H // ph, W // pw
    n_patches = gh * gw
    E = weight.shape[0]
    K = C * ph * pw
    M = B * n_patches
    out_dt = x.dtype
    compute_dt = jnp.bfloat16

    # --- im2col: non-overlapping patches, flattened in (C, ph, pw) order to
    # match the Conv2d weight layout (E, C, ph, pw). Layout plumbing only;
    # cast to bf16 first so the transposed HBM copy is half-size. ---
    patches = x.astype(compute_dt).reshape(B, C, gh, ph, gw, pw)
    patches = patches.transpose(0, 2, 4, 1, 3, 5).reshape(M, K)
    w2d = weight.astype(compute_dt).reshape(E, K).T          # (K, E)
    b2d = bias.reshape(1, E).astype(jnp.float32)

    # --- lane/sublane-friendly padded shapes & tile sizes ---
    k_pad = _round_up(K, 128)          # K is small for PatchEmbed -> single K block
    e_pad = _round_up(E, 128)          # full embed dim: weight stays VMEM-resident
    tm = _pick_tm(M)
    out_bytes = jnp.dtype(out_dt).itemsize
    while tm > 256 and _vmem_footprint_bytes(tm, k_pad, e_pad, out_bytes) > 28 * 1024 * 1024:
        tm //= 2
    m_pad = _round_up(M, tm)

    # Conditional padding: zero-width pads (the common aligned case) are free.
    if m_pad != M or k_pad != K:
        patches = jnp.pad(patches, ((0, m_pad - M), (0, k_pad - K)))
    if k_pad != K or e_pad != E:
        w2d = jnp.pad(w2d, ((0, k_pad - K), (0, e_pad - E)))
    if e_pad != E:
        b2d = jnp.pad(b2d, ((0, 0), (0, e_pad - E)))

    grid = (m_pad // tm,)

    cost = pl.CostEstimate(
        flops=2 * M * K * E,
        transcendentals=0,
        bytes_accessed=(patches.size * 2 + w2d.size * 2 + b2d.size * 4
                        + m_pad * e_pad * out_bytes),
    )

    out = pl.pallas_call(
        _patch_embed_kernel,
        out_shape=jax.ShapeDtypeStruct((m_pad, e_pad), out_dt),
        grid_spec=pltpu.PrefetchScalarGridSpec(
            num_scalar_prefetch=0,
            grid=grid,
            in_specs=[
                pl.BlockSpec((tm, k_pad), lambda i: (i, 0)),      # patches: streamed
                pl.BlockSpec((k_pad, e_pad), lambda i: (0, 0)),   # weight: resident
                pl.BlockSpec((1, e_pad), lambda i: (0, 0)),       # bias: resident
            ],
            out_specs=pl.BlockSpec((tm, e_pad), lambda i: (i, 0)),
        ),
        compiler_params=pltpu.CompilerParams(
            dimension_semantics=("parallel",),
            vmem_limit_bytes=32 * 1024 * 1024,
        ),
        cost_estimate=cost,
    )(patches, w2d, b2d)

    return out[:M, :E].reshape(B, n_patches, E)


def _to_2tuple(v):
    if isinstance(v, (tuple, list)):
        return tuple(v)
    return (v, v)


class PatchEmbed:
    """JAX/Pallas analogue of the PyTorch PatchEmbed module."""

    def __init__(self, img_size=224, patch_size=16, in_chans=3, embed_dim=768,
                 *, key=None):
        img_size = _to_2tuple(img_size)
        patch_size = _to_2tuple(patch_size)
        self.img_size = img_size
        self.patch_size = patch_size
        self.num_patches = (img_size[1] // patch_size[1]) * (img_size[0] // patch_size[0])
        self.embed_dim = embed_dim
        kw, kb = jax.random.split(jax.random.PRNGKey(0) if key is None else key)
        self.weight = 0.02 * jax.random.normal(
            kw, (embed_dim, in_chans, patch_size[0], patch_size[1]), dtype=jnp.float32)
        self.bias = 0.02 * jax.random.normal(kb, (embed_dim,), dtype=jnp.float32)

    def __call__(self, x):
        B, C, H, W = x.shape
        assert H == self.img_size[0] and W == self.img_size[1], (
            f"Input image size ({H}*{W}) doesn't match model "
            f"({self.img_size[0]}*{self.img_size[1]}).")
        return patch_embed_pallas(x, self.weight, self.bias, self.patch_size)


if __name__ == "__main__":
    key = jax.random.PRNGKey(0)
    kx, kp = jax.random.split(key)

    B, C, H, W = 2, 4, 16, 16
    patch = 4
    embed_dim = 32

    x = jax.random.normal(kx, (B, C, H, W), dtype=jnp.float32)
    module = PatchEmbed(img_size=(H, W), patch_size=patch, in_chans=C,
                        embed_dim=embed_dim, key=kp)

    out = jax.block_until_ready(module(x))
    assert out.shape == (B, module.num_patches, embed_dim), out.shape

    # Pure-JAX reference: strided conv (== patch-embedding projection) + bias.
    ref = jax.lax.conv_general_dilated(
        x, module.weight, window_strides=(patch, patch), padding="VALID",
        dimension_numbers=("NCHW", "OIHW", "NCHW"),
        precision=jax.lax.Precision.HIGHEST)
    ref = ref.reshape(B, embed_dim, -1).transpose(0, 2, 1) + module.bias.reshape(1, 1, embed_dim)

    # Kernel uses bf16 operands with f32 accumulation -> small drift vs f32 conv.
    assert jnp.allclose(out, ref, atol=1e-2, rtol=1e-2), (
        "mismatch vs reference, max abs diff = "
        f"{float(jnp.max(jnp.abs(out - ref)))}")

    print("KERNEL_OK")
</pallas_src>

<mosaic_0001>
module attributes {stable_mosaic.version = 11 : i64} {
  func.func @_patch_embed_kernel(%arg0: i32, %arg1: memref<32x128xbf16, #tpu.memory_space<vmem>>, %arg2: memref<128x128xbf16, #tpu.memory_space<vmem>>, %arg3: memref<1x128xf32, #tpu.memory_space<vmem>>, %arg4: memref<32x128xf32, #tpu.memory_space<vmem>>) attributes {dimension_semantics = [#tpu.dimension_semantics<parallel>], iteration_bounds = array<i64: 1>, scalar_prefetch = 0 : i64, scratch_operands = 0 : i64, tpu.core_type = #tpu.core_type<tc>, window_params = [{transform_indices = @transform_0, window_bounds = array<i64: 32, 128>}, {pipeline_mode = #tpu.pipeline_mode<synchronous>, transform_indices = @transform_1, window_bounds = array<i64: 128, 128>}, {pipeline_mode = #tpu.pipeline_mode<synchronous>, transform_indices = @transform_2, window_bounds = array<i64: 1, 128>}, {transform_indices = @transform_3, window_bounds = array<i64: 32, 128>}]} {
    %c0 = arith.constant 0 : index
    %c0_0 = arith.constant 0 : index
    %0 = vector.load %arg1[%c0, %c0_0] : memref<32x128xbf16, #tpu.memory_space<vmem>>, vector<32x128xbf16>
    %c0_1 = arith.constant 0 : index
    %c0_2 = arith.constant 0 : index
    %1 = vector.load %arg2[%c0_1, %c0_2] : memref<128x128xbf16, #tpu.memory_space<vmem>>, vector<128x128xbf16>
    %cst = arith.constant dense<0.000000e+00> : vector<32x128xf32>
    %2 = tpu.matmul %0, %1, %cst {dimension_numbers = #tpu.dot_dimension_numbers<[1], [0], [0], [1], [0, 0, 1, 1], [], []>} : vector<32x128xbf16>, vector<128x128xbf16>, vector<32x128xf32> -> vector<32x128xf32>
    %c0_3 = arith.constant 0 : index
    %c0_4 = arith.constant 0 : index
    %3 = vector.load %arg3[%c0_3, %c0_4] : memref<1x128xf32, #tpu.memory_space<vmem>>, vector<1x128xf32>
    %4 = vector.broadcast %3 : vector<1x128xf32> to vector<32x128xf32>
    %5 = arith.addf %2, %4 : vector<32x128xf32>
    %c0_5 = arith.constant 0 : index
    %c0_6 = arith.constant 0 : index
    %6 = vector.load %arg4[%c0_5, %c0_6] : memref<32x128xf32, #tpu.memory_space<vmem>>, vector<32x128xf32>
    tpu.vector_store %arg4[%c0_5, %c0_6], %5 {strides = array<i32>} : memref<32x128xf32, #tpu.memory_space<vmem>>, vector<32x128xf32>,
    return
  }
  func.func @transform_0(%arg0: i32) -> (i32, i32) {
    %c0_i32 = arith.constant 0 : i32
    %c0_i32_0 = arith.constant 0 : i32
    return %arg0, %c0_i32 : i32, i32
  }
  func.func @transform_1(%arg0: i32) -> (i32, i32) {
    %c0_i32 = arith.constant 0 : i32
    %c0_i32_0 = arith.constant 0 : i32
    %c0_i32_1 = arith.constant 0 : i32
    return %c0_i32, %c0_i32_0 : i32, i32
  }
  func.func @transform_2(%arg0: i32) -> (i32, i32) {
    %c0_i32 = arith.constant 0 : i32
    %c0_i32_0 = arith.constant 0 : i32
    %c0_i32_1 = arith.constant 0 : i32
    return %c0_i32, %c0_i32_0 : i32, i32
  }
  func.func @transform_3(%arg0: i32) -> (i32, i32) {
    %c0_i32 = arith.constant 0 : i32
    %c0_i32_0 = arith.constant 0 : i32
    return %arg0, %c0_i32 : i32, i32
  }
}

</mosaic_0001>

<llo_original>
// kernel: patch_embed_pallas.1
$region0: #{patch_embed_pallas.1}
  #allocation0 [shape = 'u32[]', space=smem, size = 0x4, offset = 0x4, fixed_abs, tag = 'smem constant byte address 0x4 - core index']
  #allocation1 [shape = 'u32[72,128]{1,0:T(1,128)}', space=vmem, size = 0x9000, scoped, tag = 'internal scratch']
  %s0 = inlined_call_operand.vmem [shape: bf16[32,128], index: 0, kind: input, shape index: {}]
  %s1 = inlined_call_operand.vmem [shape: bf16[128,128], index: 1, kind: input, shape index: {}]
  %s2 = inlined_call_operand.vmem [shape: f32[1,128], index: 2, kind: input, shape index: {}]
  %s3 = inlined_call_operand.hbm [shape: f32[32,128], index: 3, kind: output, shape index: {}]
  %s4 = sld [smem:[#allocation0]]
  $region22: #{patch_embed_pallas.1} parent=0
    _
  %s6 = ssub.s32 1, %s4
  %s7 = scalar_select 0, %s6, %s4
  $region1: #{patch_embed_pallas.1} parent=0
    #allocation2 [shape = 'u8[16384]{0}', space=vmem, size = 0x4000, scoped, tag = 'output window, operand 0, single buffered']
    #allocation3 [shape = 's32[1]{0}', space=sflag, size = 0x4, scoped, tag = 'scoped memory for patch_embed_pallas.1']
    %8 = vsyncpa [#allocation3], 0
    // Predicated region
    $region2: #{patch_embed_pallas.1} parent=1 // pred_check
      _
    $region3: #{patch_embed_pallas.1} parent=1 // pred_check_branch
      %10 = sbr.rel (0) target = $region5
    $region4: #{patch_embed_pallas.1} parent=1 // pred_region
      _
    $region5: #{patch_embed_pallas.1} parent=1 // pred_fallthru
      _
    // Predicated region
    $region6: #{patch_embed_pallas.1} parent=1 // pred_check
      _
    $region7: #{patch_embed_pallas.1} parent=1 // pred_check_branch
      %12 = sbr.rel (0) target = $region9
    $region8: #{patch_embed_pallas.1} parent=1 // pred_region
      _
    $region9: #{patch_embed_pallas.1} parent=1 // pred_fallthru
      _
    // Predicated region
    $region10: #{patch_embed_pallas.1} parent=1 // pred_check
      _
    $region11: #{patch_embed_pallas.1} parent=1 // pred_check_branch
      %14 = sbr.rel (0) target = $region13
    $region12: #{patch_embed_pallas.1} parent=1 // pred_region
      _
    $region13: #{patch_embed_pallas.1} parent=1 // pred_fallthru
      _
    %v15 = vld [vmem:[%s0] sm:$0xf]
    %v16 = vld [vmem:[%s0 + $0x4] sm:$0xf]
    %v17 = vld [vmem:[%s0 + $0x8] sm:$0xf]
    %v18 = vld [vmem:[%s0 + $0xc] sm:$0xf]
    %v19 = vld [vmem:[%s1] sm:$0xf]
    %v20 = vld [vmem:[%s1 + $0x4] sm:$0xf]
    %v21 = vld [vmem:[%s1 + $0x8] sm:$0xf]
    %v22 = vld [vmem:[%s1 + $0xc] sm:$0xf]
    %v23 = vld [vmem:[%s1 + $0x10] sm:$0xf]
    %v24 = vld [vmem:[%s1 + $0x14] sm:$0xf]
    %v25 = vld [vmem:[%s1 + $0x18] sm:$0xf]
    %v26 = vld [vmem:[%s1 + $0x1c] sm:$0xf]
    %v27 = vld [vmem:[%s1 + $0x20] sm:$0xf]
    %v28 = vld [vmem:[%s1 + $0x24] sm:$0xf]
    %v29 = vld [vmem:[%s1 + $0x28] sm:$0xf]
    %v30 = vld [vmem:[%s1 + $0x2c] sm:$0xf]
    %v31 = vld [vmem:[%s1 + $0x30] sm:$0xf]
    %v32 = vld [vmem:[%s1 + $0x34] sm:$0xf]
    %v33 = vld [vmem:[%s1 + $0x38] sm:$0xf]
    %v34 = vld [vmem:[%s1 + $0x3c] sm:$0xf]
    %v35 = vld [vmem:[%s2] sm:$0x1]
    %v37 = vperm.slane %v35, 0
    %v43 = vunpack.c.l.b16 %v15
    %v44 = vunpack.c.l.b16 %v16
    %v45 = vunpack.c.l.b16 %v17
    %v46 = vunpack.c.l.b16 %v18
    %v47 = vpack.c.b16 %v44, %v43
    %v48 = vpack.c.b16 %v46, %v45
    %v67 = vunpack.c.l.b16 %v19
    %v68 = vunpack.c.l.b16 %v20
    %v69 = vunpack.c.l.b16 %v21
    %v70 = vunpack.c.l.b16 %v22
    %v71 = vunpack.c.l.b16 %v23
    %v72 = vunpack.c.l.b16 %v24
    %v73 = vunpack.c.l.b16 %v25
    %v74 = vunpack.c.l.b16 %v26
    %v75 = vunpack.c.l.b16 %v27
    %v76 = vunpack.c.l.b16 %v28
    %v77 = vunpack.c.l.b16 %v29
    %v78 = vunpack.c.l.b16 %v30
    %v79 = vunpack.c.l.b16 %v31
    %v80 = vunpack.c.l.b16 %v32
    %v81 = vunpack.c.l.b16 %v33
    %v82 = vunpack.c.l.b16 %v34
    %v83 = vpack.c.b16 %v68, %v67
    %v84 = vpack.c.b16 %v70, %v69
    %v85 = vpack.c.b16 %v72, %v71
    %v86 = vpack.c.b16 %v74, %v73
    %v87 = vpack.c.b16 %v76, %v75
    %v88 = vpack.c.b16 %v78, %v77
    %v89 = vpack.c.b16 %v80, %v79
    %v90 = vpack.c.b16 %v82, %v81
    %99 = vmatpush.bf16.msra.mxu0 %v90
    %100 = vmatpush.bf16.msra.mxu0 %v89
    %101 = vmatpush.bf16.msra.mxu0 %v88
    %102 = vmatpush.bf16.msra.mxu0 %v87
    %103 = vmatpush.bf16.msra.mxu0 %v86
    %104 = vmatpush.bf16.msra.mxu0 %v85
    %105 = vmatpush.bf16.msra.mxu0 %v84
    %106 = vmatpush.bf16.msra.mxu0 %v83
    %107 = vmatmul.bf16.gmra.mxu0 %v47
    %v108 = vpop.f32.mrf.mxu0
    %v109 = vadd.f32 %v37, %v108
    %v110 = vpop.f32.mrf.mxu0
    %v111 = vadd.f32 %v37, %v110
    %112 = vmatmul.bf16.gmra.mxu0 %v48
    %v113 = vpop.f32.mrf.mxu0
    %v114 = vadd.f32 %v37, %v113
    %v115 = vpop.f32.mrf.mxu0
    %v116 = vadd.f32 %v37, %v115
    %117 = vdwg.mxu0
    %118 = vst [vmem:[#allocation2] sm:$0xff] %v109
    %119 = vst [vmem:[#allocation2 + $0x8] sm:$0xff] %v111
    %120 = vst [vmem:[#allocation2 + $0x10] sm:$0xff] %v114
    %121 = vst [vmem:[#allocation2 + $0x18] sm:$0xff] %v116
    // Predicated region
    $region14: #{patch_embed_pallas.1} parent=1 // pred_check
      _
    $region15: #{patch_embed_pallas.1} parent=1 // pred_check_branch
      %123 = sbr.rel (0) target = $region17
    $region16: #{patch_embed_pallas.1} parent=1 // pred_region
      %125 = vsyncadd [#allocation3], 0
      %s126 = sshll.u32 [#allocation2], 4
      %s127 = int_to_ptr.vmem [resolvable:$true] %s126
      %s128 = sshll.u32 %s3, 4
      %s129 = int_to_ptr.hbm [resolvable:$true] %s128
      %134 = dma.vmem_to_hbm [thread:$0]  %s127, 512, %s129, [#allocation3], 128, 128, 8
    $region17: #{patch_embed_pallas.1} parent=1 // pred_fallthru
      _
    // Predicated region
    $region18: #{patch_embed_pallas.1} parent=1 // pred_check
      _
    $region19: #{patch_embed_pallas.1} parent=1 // pred_check_branch
      %136 = sbr.rel (0) target = $region21
    $region20: #{patch_embed_pallas.1} parent=1 // pred_region
      %138 = dma.done [#allocation3], 512
    $region21: #{patch_embed_pallas.1} parent=1 // pred_fallthru
      _
    %139 = vsyncpa [#allocation3], 1

</llo_original>
